<compile_context>
chip_gen: v7x
topology: tpu7x:2x2x1
jax: 0.10.0
libtpu: 0.0.40
codegen_flags: <defaults>
</compile_context>

<pallas_src>
import jax
import jax.numpy as jnp
from jax import lax
from jax.experimental import pallas as pl
from jax.experimental.pallas import tpu as pltpu

HIDDEN_PAD = 128  # 50 -> 128: full lane width, free on VPU/EUP, clean MXU tile


def _critic_kernel(x_ref, w1_ref, b1_ref, w2_ref, b2_ref, w3_ref, b3_ref,
                   out_ref):
    x = x_ref[...]  # (tm, nS) bf16

    # Layer 1: (tm, nS) @ (nS, H) -> f32 acc, bias + tanh in f32.
    h1 = jnp.dot(x, w1_ref[...], preferred_element_type=jnp.float32)
    h1 = jnp.tanh(h1 + b1_ref[...])

    # Layer 2: (tm, H) @ (H, H) -> f32 acc, bias + tanh in f32.
    h2 = jnp.dot(h1.astype(jnp.bfloat16), w2_ref[...],
                 preferred_element_type=jnp.float32)
    h2 = jnp.tanh(h2 + b2_ref[...])

    # Critic head, lane-dense: w3 (8, H) contracted against h2 (tm, H) on the
    # H axis -> (8, tm); only row 0 of w3 is non-zero (rows 1..7 are padding),
    # so row 0 of the result is the critic value laid out along lanes.
    v = lax.dot_general(w3_ref[...], h2, (((1,), (1,)), ((), ())),
                        preferred_element_type=jnp.float32)
    out_ref[...] = (v + b3_ref[...]).astype(out_ref.dtype)


def _round_up(n, m):
    return pl.cdiv(n, m) * m


def critic_forward(x, kparams, *, tm_max=1024):
    """x: (B, nS) float32. kparams: padded (in,out)-layout params from
    pad_params_for_kernel."""
    B, nS = x.shape
    w1, b1, w2, b2, w3, b3 = (kparams["w1"], kparams["b1"], kparams["w2"],
                              kparams["b2"], kparams["w3"], kparams["b3"])

    # Tile from the tile count: minimal number of tiles for the cap, then the
    # per-tile size rounded to 256 rows (MXU-row aligned on all generations).
    num_tiles = pl.cdiv(B, tm_max)
    tm = _round_up(pl.cdiv(B, num_tiles), 256)
    B_pad = num_tiles * tm

    x = x.astype(jnp.bfloat16)  # halve the dominant HBM stream (MXU operand)
    if B_pad != B:
        x = jnp.pad(x, ((0, B_pad - B), (0, 0)))

    # Constant index_map -> weights DMA'd once, resident in VMEM across steps.
    resident = lambda a: pl.BlockSpec(a.shape, lambda i: (0, 0))

    out = pl.pallas_call(
        _critic_kernel,
        # Lane-dense output: (8, B_pad); row 0 is the critic value.
        out_shape=jax.ShapeDtypeStruct((8, B_pad), jnp.float32),
        grid=(num_tiles,),
        in_specs=[
            pl.BlockSpec((tm, nS), lambda i: (i, 0)),  # x: streamed over batch
            resident(w1), resident(b1),
            resident(w2), resident(b2),
            resident(w3), resident(b3),
        ],
        out_specs=pl.BlockSpec((8, tm), lambda i: (0, i)),
        # VMEM footprint: <100 KiB resident weights + double-buffered x/out
        # tiles (tens of KiB) — far under the scoped limit on v5e/v6e/v7x.
        compiler_params=pltpu.CompilerParams(
            dimension_semantics=("parallel",)),
    )(x, w1, b1, w2, b2, w3, b3)

    return out[0, :B].reshape(B, 1)


def init_critic_params(key, nS, hidden=50):
    """Deterministic init mimicking PyTorch nn.Linear defaults
    (uniform(-1/sqrt(fan_in), 1/sqrt(fan_in))). Weights kept as (in, out)."""
    ks = jax.random.split(key, 6)

    def lin(kw, kb, fan_in, fan_out):
        bound = 1.0 / jnp.sqrt(fan_in)
        w = jax.random.uniform(kw, (fan_in, fan_out), jnp.float32, -bound, bound)
        b = jax.random.uniform(kb, (1, fan_out), jnp.float32, -bound, bound)
        return w, b

    w1, b1 = lin(ks[0], ks[1], nS, hidden)
    w2, b2 = lin(ks[2], ks[3], hidden, hidden)
    w3, b3 = lin(ks[4], ks[5], hidden, 1)
    return dict(w1=w1, b1=b1, w2=w2, b2=b2, w3=w3, b3=b3)


def pad_params_for_kernel(p, hidden_pad=HIDDEN_PAD):
    """Zero-pad hidden 50 -> hidden_pad, cast the MXU weight operands to bf16,
    and store the head weight as an (8, hidden_pad) f32 tile (row 0 real,
    rows 1..7 zero) for the lane-dense transposed head matmul. Zero padding is
    mathematically a no-op (tanh(0)=0, padded w2/w3 rows/cols are zero)."""
    hidden = p["w1"].shape[1]
    ph = hidden_pad - hidden
    w1 = jnp.pad(p["w1"], ((0, 0), (0, ph))).astype(jnp.bfloat16)
    b1 = jnp.pad(p["b1"], ((0, 0), (0, ph)))                       # f32
    w2 = jnp.pad(p["w2"], ((0, ph), (0, ph))).astype(jnp.bfloat16)
    b2 = jnp.pad(p["b2"], ((0, 0), (0, ph)))                       # f32
    w3 = jnp.pad(p["w3"].T, ((0, 7), (0, ph)))                     # (8, H_pad) f32
    b3 = p["b3"]                                                   # (1, 1) f32
    return dict(w1=w1, b1=b1, w2=w2, b2=b2, w3=w3, b3=b3)


def critic_reference(x, p):
    h1 = jnp.tanh(x @ p["w1"] + p["b1"])
    h2 = jnp.tanh(h1 @ p["w2"] + p["b2"])
    return h2 @ p["w3"] + p["b3"]


if __name__ == "__main__":
    key = jax.random.PRNGKey(0)
    k_param, k_x = jax.random.split(key)

    B, nS = 2, 32  # small shapes: batch=2, state dim=32
    params = init_critic_params(k_param, nS)
    kparams = pad_params_for_kernel(params)
    x = jax.random.normal(k_x, (B, nS), jnp.float32)

    out = critic_forward(x, kparams)
    out = jax.block_until_ready(out)

    ref = critic_reference(x, params)
    assert out.shape == (B, 1)
    # bf16 MXU operands -> loosened tolerance vs. the f32 reference.
    assert jnp.allclose(out, ref, atol=2e-2, rtol=2e-2)

    print("KERNEL_OK")
</pallas_src>

<mosaic_0001>
module attributes {stable_mosaic.version = 11 : i64} {
  func.func @_critic_kernel(%arg0: i32, %arg1: memref<256x32xbf16, #tpu.memory_space<vmem>>, %arg2: memref<32x128xbf16, #tpu.memory_space<vmem>>, %arg3: memref<1x128xf32, #tpu.memory_space<vmem>>, %arg4: memref<128x128xbf16, #tpu.memory_space<vmem>>, %arg5: memref<1x128xf32, #tpu.memory_space<vmem>>, %arg6: memref<8x128xf32, #tpu.memory_space<vmem>>, %arg7: memref<1x1xf32, #tpu.memory_space<vmem>>, %arg8: memref<8x256xf32, #tpu.memory_space<vmem>>) attributes {dimension_semantics = [#tpu.dimension_semantics<parallel>], iteration_bounds = array<i64: 1>, scalar_prefetch = 0 : i64, scratch_operands = 0 : i64, tpu.core_type = #tpu.core_type<tc>, window_params = [{transform_indices = @transform_0, window_bounds = array<i64: 256, 32>}, {pipeline_mode = #tpu.pipeline_mode<synchronous>, transform_indices = @transform_1, window_bounds = array<i64: 32, 128>}, {pipeline_mode = #tpu.pipeline_mode<synchronous>, transform_indices = @transform_2, window_bounds = array<i64: 1, 128>}, {pipeline_mode = #tpu.pipeline_mode<synchronous>, transform_indices = @transform_3, window_bounds = array<i64: 128, 128>}, {pipeline_mode = #tpu.pipeline_mode<synchronous>, transform_indices = @transform_4, window_bounds = array<i64: 1, 128>}, {pipeline_mode = #tpu.pipeline_mode<synchronous>, transform_indices = @transform_5, window_bounds = array<i64: 8, 128>}, {pipeline_mode = #tpu.pipeline_mode<synchronous>, transform_indices = @transform_6, window_bounds = array<i64: 1, 1>}, {transform_indices = @transform_7, window_bounds = array<i64: 8, 256>}]} {
    %c0 = arith.constant 0 : index
    %c0_0 = arith.constant 0 : index
    %0 = vector.load %arg1[%c0, %c0_0] : memref<256x32xbf16, #tpu.memory_space<vmem>>, vector<256x32xbf16>
    %c0_1 = arith.constant 0 : index
    %c0_2 = arith.constant 0 : index
    %1 = vector.load %arg2[%c0_1, %c0_2] : memref<32x128xbf16, #tpu.memory_space<vmem>>, vector<32x128xbf16>
    %cst = arith.constant dense<0.000000e+00> : vector<256x128xf32>
    %2 = tpu.matmul %0, %1, %cst {dimension_numbers = #tpu.dot_dimension_numbers<[1], [0], [0], [1], [0, 0, 1, 1], [], []>} : vector<256x32xbf16>, vector<32x128xbf16>, vector<256x128xf32> -> vector<256x128xf32>
    %c0_3 = arith.constant 0 : index
    %c0_4 = arith.constant 0 : index
    %3 = vector.load %arg3[%c0_3, %c0_4] : memref<1x128xf32, #tpu.memory_space<vmem>>, vector<1x128xf32>
    %4 = vector.broadcast %3 : vector<1x128xf32> to vector<256x128xf32>
    %5 = arith.addf %2, %4 : vector<256x128xf32>
    %6 = math.tanh %5 : vector<256x128xf32>
    %7 = arith.truncf %6 : vector<256x128xf32> to vector<256x128xbf16>
    %c0_5 = arith.constant 0 : index
    %c0_6 = arith.constant 0 : index
    %8 = vector.load %arg4[%c0_5, %c0_6] : memref<128x128xbf16, #tpu.memory_space<vmem>>, vector<128x128xbf16>
    %cst_7 = arith.constant dense<0.000000e+00> : vector<256x128xf32>
    %9 = tpu.matmul %7, %8, %cst_7 {dimension_numbers = #tpu.dot_dimension_numbers<[1], [0], [0], [1], [0, 0, 1, 1], [], []>} : vector<256x128xbf16>, vector<128x128xbf16>, vector<256x128xf32> -> vector<256x128xf32>
    %c0_8 = arith.constant 0 : index
    %c0_9 = arith.constant 0 : index
    %10 = vector.load %arg5[%c0_8, %c0_9] : memref<1x128xf32, #tpu.memory_space<vmem>>, vector<1x128xf32>
    %11 = vector.broadcast %10 : vector<1x128xf32> to vector<256x128xf32>
    %12 = arith.addf %9, %11 : vector<256x128xf32>
    %13 = math.tanh %12 : vector<256x128xf32>
    %c0_10 = arith.constant 0 : index
    %c0_11 = arith.constant 0 : index
    %14 = vector.load %arg6[%c0_10, %c0_11] : memref<8x128xf32, #tpu.memory_space<vmem>>, vector<8x128xf32>
    %cst_12 = arith.constant dense<0.000000e+00> : vector<8x256xf32>
    %15 = tpu.matmul %14, %13, %cst_12 {dimension_numbers = #tpu.dot_dimension_numbers<[1], [1], [0], [0], [0, 0, 1, 0], [], []>} : vector<8x128xf32>, vector<256x128xf32>, vector<8x256xf32> -> vector<8x256xf32>
    %c0_13 = arith.constant 0 : index
    %c0_14 = arith.constant 0 : index
    %16 = vector.load %arg7[%c0_13, %c0_14] : memref<1x1xf32, #tpu.memory_space<vmem>>, vector<1x1xf32>
    %17 = vector.broadcast %16 : vector<1x1xf32> to vector<8x256xf32>
    %18 = arith.addf %15, %17 : vector<8x256xf32>
    %c0_15 = arith.constant 0 : index
    %c0_16 = arith.constant 0 : index
    %19 = vector.load %arg8[%c0_15, %c0_16] : memref<8x256xf32, #tpu.memory_space<vmem>>, vector<8x256xf32>
    tpu.vector_store %arg8[%c0_15, %c0_16], %18 {strides = array<i32>} : memref<8x256xf32, #tpu.memory_space<vmem>>, vector<8x256xf32>,
    return
  }
  func.func @transform_0(%arg0: i32) -> (i32, i32) {
    %c0_i32 = arith.constant 0 : i32
    %c0_i32_0 = arith.constant 0 : i32
    return %arg0, %c0_i32 : i32, i32
  }
  func.func @transform_1(%arg0: i32) -> (i32, i32) {
    %c0_i32 = arith.constant 0 : i32
    %c0_i32_0 = arith.constant 0 : i32
    %c0_i32_1 = arith.constant 0 : i32
    return %c0_i32, %c0_i32_0 : i32, i32
  }
  func.func @transform_2(%arg0: i32) -> (i32, i32) {
    %c0_i32 = arith.constant 0 : i32
    %c0_i32_0 = arith.constant 0 : i32
    %c0_i32_1 = arith.constant 0 : i32
    return %c0_i32, %c0_i32_0 : i32, i32
  }
  func.func @transform_3(%arg0: i32) -> (i32, i32) {
    %c0_i32 = arith.constant 0 : i32
    %c0_i32_0 = arith.constant 0 : i32
    %c0_i32_1 = arith.constant 0 : i32
    return %c0_i32, %c0_i32_0 : i32, i32
  }
  func.func @transform_4(%arg0: i32) -> (i32, i32) {
    %c0_i32 = arith.constant 0 : i32
    %c0_i32_0 = arith.constant 0 : i32
    %c0_i32_1 = arith.constant 0 : i32
    return %c0_i32, %c0_i32_0 : i32, i32
  }
  func.func @transform_5(%arg0: i32) -> (i32, i32) {
    %c0_i32 = arith.constant 0 : i32
    %c0_i32_0 = arith.constant 0 : i32
    %c0_i32_1 = arith.constant 0 : i32
    return %c0_i32, %c0_i32_0 : i32, i32
  }
  func.func @transform_6(%arg0: i32) -> (i32, i32) {
    %c0_i32 = arith.constant 0 : i32
    %c0_i32_0 = arith.constant 0 : i32
    %c0_i32_1 = arith.constant 0 : i32
    return %c0_i32, %c0_i32_0 : i32, i32
  }
  func.func @transform_7(%arg0: i32) -> (i32, i32) {
    %c0_i32 = arith.constant 0 : i32
    %c0_i32_0 = arith.constant 0 : i32
    return %c0_i32, %arg0 : i32, i32
  }
}

</mosaic_0001>

<llo_original>
// kernel: tpu_custom_call.1
$region0: #{tpu_custom_call.1}
  #allocation0 [shape = 'u32[]', space=smem, size = 0x4, offset = 0x4, fixed_abs, tag = 'smem constant byte address 0x4 - core index']
  #allocation1 [shape = 'u32[144,128]{1,0:T(1,128)}', space=vmem, size = 0x12000, scoped, tag = 'internal scratch']
  #allocation2 [shape = 'f32[1,1]{1,0:T(1,128)S(1)}', space=vmem, size = 0x200, scoped, tag = 'scoped memory for tpu_custom_call.1']
  %s0 = inlined_call_operand.vmem [shape: bf16[256,32], index: 0, kind: input, shape index: {}]
  %s1 = inlined_call_operand.vmem [shape: bf16[32,128], index: 1, kind: input, shape index: {}]
  %s2 = inlined_call_operand.vmem [shape: f32[1,128], index: 2, kind: input, shape index: {}]
  %s3 = inlined_call_operand.vmem [shape: bf16[128,128], index: 3, kind: input, shape index: {}]
  %s4 = inlined_call_operand.vmem [shape: f32[1,128], index: 4, kind: input, shape index: {}]
  %s5 = inlined_call_operand.vmem [shape: f32[8,128], index: 5, kind: input, shape index: {}]
  %s6 = inlined_call_operand.<no memory space> [shape: f32[1,1], index: 6, kind: input, shape index: {}]
  %s7 = inlined_call_operand.hbm [shape: f32[8,256], index: 7, kind: output, shape index: {}]
  %s8 = sld [smem:[#allocation0]]
  $region38: #{tpu_custom_call.1} parent=0
    _
  %s10 = ssub.s32 1, %s8
  %s11 = scalar_select 0, %s10, %s8
  %v12 = vstv %s6
  %13 = vst [vmem:[#allocation2] sm:$0x1] %v12
  $region1: #{tpu_custom_call.1} parent=0
    #allocation3 [shape = 'u8[8192]{0}', space=vmem, size = 0x2000, scoped, tag = 'output window, operand 0, single buffered']
    #allocation4 [shape = 's32[1]{0}', space=sflag, size = 0x4, scoped, tag = 'scoped memory for tpu_custom_call.1']
    %14 = vsyncpa [#allocation4], 0
    // Predicated region
    $region2: #{tpu_custom_call.1} parent=1 // pred_check
      _
    $region3: #{tpu_custom_call.1} parent=1 // pred_check_branch
      %16 = sbr.rel (0) target = $region5
    $region4: #{tpu_custom_call.1} parent=1 // pred_region
      _
    $region5: #{tpu_custom_call.1} parent=1 // pred_fallthru
      _
    // Predicated region
    $region6: #{tpu_custom_call.1} parent=1 // pred_check
      _
    $region7: #{tpu_custom_call.1} parent=1 // pred_check_branch
      %18 = sbr.rel (0) target = $region9
    $region8: #{tpu_custom_call.1} parent=1 // pred_region
      _
    $region9: #{tpu_custom_call.1} parent=1 // pred_fallthru
      _
    // Predicated region
    $region10: #{tpu_custom_call.1} parent=1 // pred_check
      _
    $region11: #{tpu_custom_call.1} parent=1 // pred_check_branch
      %20 = sbr.rel (0) target = $region13
    $region12: #{tpu_custom_call.1} parent=1 // pred_region
      _
    $region13: #{tpu_custom_call.1} parent=1 // pred_fallthru
      _
    // Predicated region
    $region14: #{tpu_custom_call.1} parent=1 // pred_check
      _
    $region15: #{tpu_custom_call.1} parent=1 // pred_check_branch
      %22 = sbr.rel (0) target = $region17
    $region16: #{tpu_custom_call.1} parent=1 // pred_region
      _
    $region17: #{tpu_custom_call.1} parent=1 // pred_fallthru
      _
    // Predicated region
    $region18: #{tpu_custom_call.1} parent=1 // pred_check
      _
    $region19: #{tpu_custom_call.1} parent=1 // pred_check_branch
      %24 = sbr.rel (0) target = $region21
    $region20: #{tpu_custom_call.1} parent=1 // pred_region
      _
    $region21: #{tpu_custom_call.1} parent=1 // pred_fallthru
      _
    // Predicated region
    $region22: #{tpu_custom_call.1} parent=1 // pred_check
      _
    $region23: #{tpu_custom_call.1} parent=1 // pred_check_branch
      %26 = sbr.rel (0) target = $region25
    $region24: #{tpu_custom_call.1} parent=1 // pred_region
      _
    $region25: #{tpu_custom_call.1} parent=1 // pred_fallthru
      _
    // Predicated region
    $region26: #{tpu_custom_call.1} parent=1 // pred_check
      _
    $region27: #{tpu_custom_call.1} parent=1 // pred_check_branch
      %28 = sbr.rel (0) target = $region29
    $region28: #{tpu_custom_call.1} parent=1 // pred_region
      _
    $region29: #{tpu_custom_call.1} parent=1 // pred_fallthru
      _
    %v30 = vld [vmem:[%s0] sm:$0xf]
    %v31 = vld [vmem:[%s0 + $0x4] sm:$0xf]
    %v32 = vld [vmem:[%s0 + $0x8] sm:$0xf]
    %v33 = vld [vmem:[%s0 + $0xc] sm:$0xf]
    %v34 = vld [vmem:[%s0 + $0x10] sm:$0xf]
    %v35 = vld [vmem:[%s0 + $0x14] sm:$0xf]
    %v36 = vld [vmem:[%s0 + $0x18] sm:$0xf]
    %v37 = vld [vmem:[%s0 + $0x1c] sm:$0xf]
    %v38 = vld [vmem:[%s0 + $0x20] sm:$0xf]
    %v39 = vld [vmem:[%s0 + $0x24] sm:$0xf]
    %v40 = vld [vmem:[%s0 + $0x28] sm:$0xf]
    %v41 = vld [vmem:[%s0 + $0x2c] sm:$0xf]
    %v42 = vld [vmem:[%s0 + $0x30] sm:$0xf]
    %v43 = vld [vmem:[%s0 + $0x34] sm:$0xf]
    %v44 = vld [vmem:[%s0 + $0x38] sm:$0xf]
    %v45 = vld [vmem:[%s0 + $0x3c] sm:$0xf]
    %v46 = vld [vmem:[%s0 + $0x40] sm:$0xf]
    %v47 = vld [vmem:[%s0 + $0x44] sm:$0xf]
    %v48 = vld [vmem:[%s0 + $0x48] sm:$0xf]
    %v49 = vld [vmem:[%s0 + $0x4c] sm:$0xf]
    %v50 = vld [vmem:[%s0 + $0x50] sm:$0xf]
    %v51 = vld [vmem:[%s0 + $0x54] sm:$0xf]
    %v52 = vld [vmem:[%s0 + $0x58] sm:$0xf]
    %v53 = vld [vmem:[%s0 + $0x5c] sm:$0xf]
    %v54 = vld [vmem:[%s0 + $0x60] sm:$0xf]
    %v55 = vld [vmem:[%s0 + $0x64] sm:$0xf]
    %v56 = vld [vmem:[%s0 + $0x68] sm:$0xf]
    %v57 = vld [vmem:[%s0 + $0x6c] sm:$0xf]
    %v58 = vld [vmem:[%s0 + $0x70] sm:$0xf]
    %v59 = vld [vmem:[%s0 + $0x74] sm:$0xf]
    %v60 = vld [vmem:[%s0 + $0x78] sm:$0xf]
    %v61 = vld [vmem:[%s0 + $0x7c] sm:$0xf]
    %v62 = vld [vmem:[%s1] sm:$0xf]
    %v63 = vld [vmem:[%s1 + $0x4] sm:$0xf]
    %v64 = vld [vmem:[%s1 + $0x8] sm:$0xf]
    %v65 = vld [vmem:[%s1 + $0xc] sm:$0xf]
    %v66 = vld [vmem:[%s2] sm:$0x1]
    %v68 = vlaneseq
    %v69 = vshrl.u32 %v68, 7
    %v70 = vsub.s32 0, %v69
    %v71 = vrot.slane %v66, %v70
    %v105 = vunpack.c.l.b16 %v30
    %v106 = vunpack.c.l.b16 %v31
    %v107 = vunpack.c.l.b16 %v32
    %v108 = vunpack.c.l.b16 %v33
    %v109 = vunpack.c.l.b16 %v34
    %v110 = vunpack.c.l.b16 %v35
    %v111 = vunpack.c.l.b16 %v36
    %v112 = vunpack.c.l.b16 %v37
    %v113 = vunpack.c.l.b16 %v38
    %v114 = vunpack.c.l.b16 %v39
    %v115 = vunpack.c.l.b16 %v40
    %v116 = vunpack.c.l.b16 %v41
    %v117 = vunpack.c.l.b16 %v42
    %v118 = vunpack.c.l.b16 %v43
    %v119 = vunpack.c.l.b16 %v44
    %v120 = vunpack.c.l.b16 %v45
    %v121 = vunpack.c.l.b16 %v46
    %v122 = vunpack.c.l.b16 %v47
    %v123 = vunpack.c.l.b16 %v48
    %v124 = vunpack.c.l.b16 %v49
    %v125 = vunpack.c.l.b16 %v50
    %v126 = vunpack.c.l.b16 %v51
    %v127 = vunpack.c.l.b16 %v52
    %v128 = vunpack.c.l.b16 %v53
    %v129 = vunpack.c.l.b16 %v54
    %v130 = vunpack.c.l.b16 %v55
    %v131 = vunpack.c.l.b16 %v56
    %v132 = vunpack.c.l.b16 %v57
    %v133 = vunpack.c.l.b16 %v58
    %v134 = vunpack.c.l.b16 %v59
    %v135 = vunpack.c.l.b16 %v60
    %v136 = vunpack.c.l.b16 %v61
    %v137 = vpack.c.b16 %v106, %v105
    %v138 = vpack.c.b16 %v108, %v107
    %v139 = vpack.c.b16 %v110, %v109
    %v140 = vpack.c.b16 %v112, %v111
    %v141 = vpack.c.b16 %v114, %v113
    %v142 = vpack.c.b16 %v116, %v115
    %v143 = vpack.c.b16 %v118, %v117
    %v144 = vpack.c.b16 %v120, %v119
    %v145 = vpack.c.b16 %v122, %v121
    %v146 = vpack.c.b16 %v124, %v123
    %v147 = vpack.c.b16 %v126, %v125
    %v148 = vpack.c.b16 %v128, %v127
    %v149 = vpack.c.b16 %v130, %v129
    %v150 = vpack.c.b16 %v132, %v131
    %v151 = vpack.c.b16 %v134, %v133
    %v152 = vpack.c.b16 %v136, %v135
    %v157 = vunpack.c.l.b16 %v62
    %v158 = vunpack.c.l.b16 %v63
    %v159 = vunpack.c.l.b16 %v64
    %v160 = vunpack.c.l.b16 %v65
    %v161 = vpack.c.b16 %v158, %v157
    %v162 = vpack.c.b16 %v160, %v159
    %vm165 = vcmask 261120
    %v167 = vsel %vm165, %v137, 0
    %v170 = vsel %vm165, %v138, 0
    %v173 = vsel %vm165, %v139, 0
    %v176 = vsel %vm165, %v140, 0
    %v179 = vsel %vm165, %v141, 0
    %v182 = vsel %vm165, %v142, 0
    %v185 = vsel %vm165, %v143, 0
    %v188 = vsel %vm165, %v144, 0
    %v191 = vsel %vm165, %v145, 0
    %v194 = vsel %vm165, %v146, 0
    %v197 = vsel %vm165, %v147, 0
    %v200 = vsel %vm165, %v148, 0
    %v203 = vsel %vm165, %v149, 0
    %v206 = vsel %vm165, %v150, 0
    %v209 = vsel %vm165, %v151, 0
    %v212 = vsel %vm165, %v152, 0
    %214 = vmatprep.subr.bf16.mxu0 0
    %215 = vmatpush1.bf16.msra.mxu0 %v161
    %216 = vmatprep.subr.bf16.mxu0 0
    %217 = vmatpush1.bf16.msra.mxu0 %v162
    %218 = vmatprep.subr.bf16.mxu0 0
    %219 = vmatpush1.bf16.msra.mxu0 0
    %220 = vmatprep.subr.bf16.mxu0 0
    %221 = vmatpush1.bf16.msra.mxu0 0
    %222 = vmatprep.subr.bf16.mxu0 0
    %223 = vmatpush1.bf16.msra.mxu0 0
    %224 = vmatprep.subr.bf16.mxu0 0
    %225 = vmatpush1.bf16.msra.mxu0 0
    %226 = vmatprep.subr.bf16.mxu0 0
    %227 = vmatpush1.bf16.msra.mxu0 0
    %228 = vmatprep.subr.bf16.mxu0 0
    %229 = vmatpush1.bf16.msra.mxu0 0
    %230 = vmatprep.subr.bf16.mxu0 0
    %231 = vmatpush1.bf16.msra.mxu0 0
    %232 = vmatprep.subr.bf16.mxu0 0
    %233 = vmatpush1.bf16.msra.mxu0 0
    %234 = vmatprep.subr.bf16.mxu0 0
    %235 = vmatpush1.bf16.msra.mxu0 0
    %236 = vmatprep.subr.bf16.mxu0 0
    %237 = vmatpush1.bf16.msra.mxu0 0
    %238 = vmatprep.subr.bf16.mxu0 0
    %239 = vmatpush1.bf16.msra.mxu0 0
    %240 = vmatprep.subr.bf16.mxu0 0
    %241 = vmatpush1.bf16.msra.mxu0 0
    %242 = vmatprep.subr.bf16.mxu0 0
    %243 = vmatpush1.bf16.msra.mxu0 0
    %244 = vmatprep.subr.bf16.mxu0 0
    %245 = vmatpush1.bf16.msra.mxu0 0
    %246 = vmatprep.mubr.bf16.mxu0 0
    %247 = vmatmul.mubr.bf16.gmra.mrb[0].mxu0 %v167
    %v248 = vpop.f32.mrb[0].mxu0
    %v249 = vadd.f32 %v71, %v248
    %v250 = vpop.f32.mrb[0].mxu0
    %v251 = vpop.f32.mrb[0].mxu0
    %v252 = vadd.f32 %v71, %v251
    %v253 = vpop.f32.mrb[0].mxu0
    %254 = vmatprep.mubr.bf16.mxu0 0
    %255 = vmatmul.mubr.bf16.gmra.mrb[0].mxu0 %v170
    %v256 = vpop.f32.mrb[0].mxu0
    %v257 = vadd.f32 %v71, %v256
    %v258 = vpop.f32.mrb[0].mxu0
    %v259 = vpop.f32.mrb[0].mxu0
    %v260 = vadd.f32 %v71, %v259
    %v261 = vpop.f32.mrb[0].mxu0
    %262 = vmatprep.mubr.bf16.mxu0 0
    %263 = vmatmul.mubr.bf16.gmra.mrb[0].mxu0 %v173
    %v264 = vpop.f32.mrb[0].mxu0
    %v265 = vadd.f32 %v71, %v264
    %v266 = vpop.f32.mrb[0].mxu0
    %v267 = vpop.f32.mrb[0].mxu0
    %v268 = vadd.f32 %v71, %v267
    %v269 = vpop.f32.mrb[0].mxu0
    %270 = vmatprep.mubr.bf16.mxu0 0
    %271 = vmatmul.mubr.bf16.gmra.mrb[0].mxu0 %v176
    %v272 = vpop.f32.mrb[0].mxu0
    %v273 = vadd.f32 %v71, %v272
    %v274 = vpop.f32.mrb[0].mxu0
    %v275 = vpop.f32.mrb[0].mxu0
    %v276 = vadd.f32 %v71, %v275
    %v277 = vpop.f32.mrb[0].mxu0
    %278 = vmatprep.mubr.bf16.mxu0 0
    %279 = vmatmul.mubr.bf16.gmra.mrb[0].mxu0 %v179
    %v280 = vpop.f32.mrb[0].mxu0
    %v281 = vadd.f32 %v71, %v280
    %v282 = vpop.f32.mrb[0].mxu0
    %v283 = vpop.f32.mrb[0].mxu0
    %v284 = vadd.f32 %v71, %v283
    %v285 = vpop.f32.mrb[0].mxu0
    %286 = vmatprep.mubr.bf16.mxu0 0
    %287 = vmatmul.mubr.bf16.gmra.mrb[0].mxu0 %v182
    %v288 = vpop.f32.mrb[0].mxu0
    %v289 = vadd.f32 %v71, %v288
    %v290 = vpop.f32.mrb[0].mxu0
    %v291 = vpop.f32.mrb[0].mxu0
    %v292 = vadd.f32 %v71, %v291
    %v293 = vpop.f32.mrb[0].mxu0
    %294 = vmatprep.mubr.bf16.mxu0 0
    %295 = vmatmul.mubr.bf16.gmra.mrb[0].mxu0 %v185
    %v296 = vpop.f32.mrb[0].mxu0
    %v297 = vadd.f32 %v71, %v296
    %v298 = vpop.f32.mrb[0].mxu0
    %v299 = vpop.f32.mrb[0].mxu0
    %v300 = vadd.f32 %v71, %v299
    %v301 = vpop.f32.mrb[0].mxu0
    %302 = vmatprep.mubr.bf16.mxu0 0
    %303 = vmatmul.mubr.bf16.gmra.mrb[0].mxu0 %v188
    %v304 = vpop.f32.mrb[0].mxu0
    %v305 = vadd.f32 %v71, %v304
    %v306 = vpop.f32.mrb[0].mxu0
    %v307 = vpop.f32.mrb[0].mxu0
    %v308 = vadd.f32 %v71, %v307
    %v309 = vpop.f32.mrb[0].mxu0
    %310 = vmatprep.mubr.bf16.mxu0 0
    %311 = vmatmul.mubr.bf16.gmra.mrb[0].mxu0 %v191
    %v312 = vpop.f32.mrb[0].mxu0
    %v313 = vadd.f32 %v71, %v312
    %v314 = vpop.f32.mrb[0].mxu0
    %v315 = vpop.f32.mrb[0].mxu0
    %v316 = vadd.f32 %v71, %v315
    %v317 = vpop.f32.mrb[0].mxu0
    %318 = vmatprep.mubr.bf16.mxu0 0
    %319 = vmatmul.mubr.bf16.gmra.mrb[0].mxu0 %v194
    %v320 = vpop.f32.mrb[0].mxu0
    %v321 = vadd.f32 %v71, %v320
    %v322 = vpop.f32.mrb[0].mxu0
    %v323 = vpop.f32.mrb[0].mxu0
    %v324 = vadd.f32 %v71, %v323
    %v325 = vpop.f32.mrb[0].mxu0
    %326 = vmatprep.mubr.bf16.mxu0 0
    %327 = vmatmul.mubr.bf16.gmra.mrb[0].mxu0 %v197
    %v328 = vpop.f32.mrb[0].mxu0
    %v329 = vadd.f32 %v71, %v328
    %v330 = vpop.f32.mrb[0].mxu0
    %v331 = vpop.f32.mrb[0].mxu0
    %v332 = vadd.f32 %v71, %v331
    %v333 = vpop.f32.mrb[0].mxu0
    %334 = vmatprep.mubr.bf16.mxu0 0
    %335 = vmatmul.mubr.bf16.gmra.mrb[0].mxu0 %v200
    %v336 = vpop.f32.mrb[0].mxu0
    %v337 = vadd.f32 %v71, %v336
    %v338 = vpop.f32.mrb[0].mxu0
    %v339 = vpop.f32.mrb[0].mxu0
    %v340 = vadd.f32 %v71, %v339
    %v341 = vpop.f32.mrb[0].mxu0
    %342 = vmatprep.mubr.bf16.mxu0 0
    %343 = vmatmul.mubr.bf16.gmra.mrb[0].mxu0 %v203
    %v344 = vpop.f32.mrb[0].mxu0
    %v345 = vadd.f32 %v71, %v344
    %v346 = vpop.f32.mrb[0].mxu0
    %v347 = vpop.f32.mrb[0].mxu0
    %v348 = vadd.f32 %v71, %v347
    %v349 = vpop.f32.mrb[0].mxu0
    %350 = vmatprep.mubr.bf16.mxu0 0
    %351 = vmatmul.mubr.bf16.gmra.mrb[0].mxu0 %v206
    %v352 = vpop.f32.mrb[0].mxu0
    %v353 = vadd.f32 %v71, %v352
    %v354 = vpop.f32.mrb[0].mxu0
    %v355 = vpop.f32.mrb[0].mxu0
    %v356 = vadd.f32 %v71, %v355
    %v357 = vpop.f32.mrb[0].mxu0
    %358 = vmatprep.mubr.bf16.mxu0 0
    %359 = vmatmul.mubr.bf16.gmra.mrb[0].mxu0 %v209
    %v360 = vpop.f32.mrb[0].mxu0
    %v361 = vadd.f32 %v71, %v360
    %v362 = vpop.f32.mrb[0].mxu0
    %v363 = vpop.f32.mrb[0].mxu0
    %v364 = vadd.f32 %v71, %v363
    %v365 = vpop.f32.mrb[0].mxu0
    %366 = vmatprep.mubr.bf16.mxu0 0
    %367 = vmatmul.mubr.bf16.gmra.mrb[0].mxu0 %v212
    %v368 = vpop.f32.mrb[0].mxu0
    %v369 = vadd.f32 %v71, %v368
    %v370 = vpop.f32.mrb[0].mxu0
    %v371 = vpop.f32.mrb[0].mxu0
    %v372 = vadd.f32 %v71, %v371
    %v373 = vpop.f32.mrb[0].mxu0
    %374 = vdwg.mxu0
    %v375 = vtanh.pop %v249
    %v376 = vtanh.pop %v252
    %v377 = vtanh.pop %v257
    %v378 = vtanh.pop %v260
    %v379 = vtanh.pop %v265
    %v380 = vtanh.pop %v268
    %v381 = vtanh.pop %v273
    %v382 = vtanh.pop %v276
    %v383 = vtanh.pop %v281
    %v384 = vtanh.pop %v284
    %v385 = vtanh.pop %v289
    %v386 = vtanh.pop %v292
    %v387 = vtanh.pop %v297
    %v388 = vtanh.pop %v300
    %v389 = vtanh.pop %v305
    %v390 = vtanh.pop %v308
    %v391 = vtanh.pop %v313
    %v392 = vtanh.pop %v316
    %v393 = vtanh.pop %v321
    %v394 = vtanh.pop %v324
    %v395 = vtanh.pop %v329
    %v396 = vtanh.pop %v332
    %v397 = vtanh.pop %v337
    %v398 = vtanh.pop %v340
    %v399 = vtanh.pop %v345
    %v400 = vtanh.pop %v348
    %v401 = vtanh.pop %v353
    %v402 = vtanh.pop %v356
    %v403 = vtanh.pop %v361
    %v404 = vtanh.pop %v364
    %v405 = vtanh.pop %v369
    %v406 = vtanh.pop %v372
    %v407 = vpack.c.bf16 %v376, %v375
    %v408 = vpack.c.bf16 %v378, %v377
    %v409 = vpack.c.bf16 %v380, %v379
    %v410 = vpack.c.bf16 %v382, %v381
    %v411 = vpack.c.bf16 %v384, %v383
    %v412 = vpack.c.bf16 %v386, %v385
    %v413 = vpack.c.bf16 %v388, %v387
    %v414 = vpack.c.bf16 %v390, %v389
    %v415 = vpack.c.bf16 %v392, %v391
    %v416 = vpack.c.bf16 %v394, %v393
    %v417 = vpack.c.bf16 %v396, %v395
    %v418 = vpack.c.bf16 %v398, %v397
    %v419 = vpack.c.bf16 %v400, %v399
    %v420 = vpack.c.bf16 %v402, %v401
    %v421 = vpack.c.bf16 %v404, %v403
    %v422 = vpack.c.bf16 %v406, %v405
    %v423 = vld [vmem:[%s3] sm:$0xf]
    %v424 = vld [vmem:[%s3 + $0x4] sm:$0xf]
    %v425 = vld [vmem:[%s3 + $0x8] sm:$0xf]
    %v426 = vld [vmem:[%s3 + $0xc] sm:$0xf]
    %v427 = vld [vmem:[%s3 + $0x10] sm:$0xf]
    %v428 = vld [vmem:[%s3 + $0x14] sm:$0xf]
    %v429 = vld [vmem:[%s3 + $0x18] sm:$0xf]
    %v430 = vld [vmem:[%s3 + $0x1c] sm:$0xf]
    %v431 = vld [vmem:[%s3 + $0x20] sm:$0xf]
    %v432 = vld [vmem:[%s3 + $0x24] sm:$0xf]
    %v433 = vld [vmem:[%s3 + $0x28] sm:$0xf]
    %v434 = vld [vmem:[%s3 + $0x2c] sm:$0xf]
    %v435 = vld [vmem:[%s3 + $0x30] sm:$0xf]
    %v436 = vld [vmem:[%s3 + $0x34] sm:$0xf]
    %v437 = vld [vmem:[%s3 + $0x38] sm:$0xf]
    %v438 = vld [vmem:[%s3 + $0x3c] sm:$0xf]
    %v439 = vld [vmem:[%s4] sm:$0x1]
    %v441 = vlaneseq
    %v442 = vshrl.u32 %v441, 7
    %v443 = vsub.s32 0, %v442
    %v444 = vrot.slane %v439, %v443
    %v462 = vunpack.c.l.b16 %v423
    %v463 = vunpack.c.l.b16 %v424
    %v464 = vunpack.c.l.b16 %v425
    %v465 = vunpack.c.l.b16 %v426
    %v466 = vunpack.c.l.b16 %v427
    %v467 = vunpack.c.l.b16 %v428
    %v468 = vunpack.c.l.b16 %v429
    %v469 = vunpack.c.l.b16 %v430
    %v470 = vunpack.c.l.b16 %v431
    %v471 = vunpack.c.l.b16 %v432
    %v472 = vunpack.c.l.b16 %v433
    %v473 = vunpack.c.l.b16 %v434
    %v474 = vunpack.c.l.b16 %v435
    %v475 = vunpack.c.l.b16 %v436
    %v476 = vunpack.c.l.b16 %v437
    %v477 = vunpack.c.l.b16 %v438
    %v478 = vpack.c.b16 %v463, %v462
    %v479 = vpack.c.b16 %v465, %v464
    %v480 = vpack.c.b16 %v467, %v466
    %v481 = vpack.c.b16 %v469, %v468
    %v482 = vpack.c.b16 %v471, %v470
    %v483 = vpack.c.b16 %v473, %v472
    %v484 = vpack.c.b16 %v475, %v474
    %v485 = vpack.c.b16 %v477, %v476
    %494 = vmatprep.subr.bf16.mxu0 0
    %495 = vmatpush1.bf16.msra.mxu0 %v478
    %496 = vmatprep.subr.bf16.mxu0 0
    %497 = vmatpush1.bf16.msra.mxu0 %v479
    %498 = vmatprep.subr.bf16.mxu0 0
    %499 = vmatpush1.bf16.msra.mxu0 %v480
    %500 = vmatprep.subr.bf16.mxu0 0
    %501 = vmatpush1.bf16.msra.mxu0 %v481
    %502 = vmatprep.subr.bf16.mxu0 0
    %503 = vmatpush1.bf16.msra.mxu0 %v482
    %504 = vmatprep.subr.bf16.mxu0 0
    %505 = vmatpush1.bf16.msra.mxu0 %v483
    %506 = vmatprep.subr.bf16.mxu0 0
    %507 = vmatpush1.bf16.msra.mxu0 %v484
    %508 = vmatprep.subr.bf16.mxu0 0
    %509 = vmatpush1.bf16.msra.mxu0 %v485
    %510 = vmatprep.subr.bf16.mxu0 0
    %511 = vmatpush1.bf16.msra.mxu0 0
    %512 = vmatprep.subr.bf16.mxu0 0
    %513 = vmatpush1.bf16.msra.mxu0 0
    %514 = vmatprep.subr.bf16.mxu0 0
    %515 = vmatpush1.bf16.msra.mxu0 0
    %516 = vmatprep.subr.bf16.mxu0 0
    %517 = vmatpush1.bf16.msra.mxu0 0
    %518 = vmatprep.subr.bf16.mxu0 0
    %519 = vmatpush1.bf16.msra.mxu0 0
    %520 = vmatprep.subr.bf16.mxu0 0
    %521 = vmatpush1.bf16.msra.mxu0 0
    %522 = vmatprep.subr.bf16.mxu0 0
    %523 = vmatpush1.bf16.msra.mxu0 0
    %524 = vmatprep.subr.bf16.mxu0 0
    %525 = vmatpush1.bf16.msra.mxu0 0
    %526 = vmatprep.mubr.bf16.mxu0 0
    %527 = vmatmul.mubr.bf16.gmra.mrb[0].mxu0 %v407
    %v528 = vpop.f32.mrb[0].mxu0
    %v529 = vadd.f32 %v444, %v528
    %v530 = vpop.f32.mrb[0].mxu0
    %v531 = vpop.f32.mrb[0].mxu0
    %v532 = vadd.f32 %v444, %v531
    %v533 = vpop.f32.mrb[0].mxu0
    %534 = vmatprep.mubr.bf16.mxu0 0
    %535 = vmatmul.mubr.bf16.gmra.mrb[0].mxu0 %v408
    %v536 = vpop.f32.mrb[0].mxu0
    %v537 = vadd.f32 %v444, %v536
    %v538 = vpop.f32.mrb[0].mxu0
    %v539 = vpop.f32.mrb[0].mxu0
    %v540 = vadd.f32 %v444, %v539
    %v541 = vpop.f32.mrb[0].mxu0
    %542 = vmatprep.mubr.bf16.mxu0 0
    %543 = vmatmul.mubr.bf16.gmra.mrb[0].mxu0 %v409
    %v544 = vpop.f32.mrb[0].mxu0
    %v545 = vadd.f32 %v444, %v544
    %v546 = vpop.f32.mrb[0].mxu0
    %v547 = vpop.f32.mrb[0].mxu0
    %v548 = vadd.f32 %v444, %v547
    %v549 = vpop.f32.mrb[0].mxu0
    %550 = vmatprep.mubr.bf16.mxu0 0
    %551 = vmatmul.mubr.bf16.gmra.mrb[0].mxu0 %v410
    %v552 = vpop.f32.mrb[0].mxu0
    %v553 = vadd.f32 %v444, %v552
    %v554 = vpop.f32.mrb[0].mxu0
    %v555 = vpop.f32.mrb[0].mxu0
    %v556 = vadd.f32 %v444, %v555
    %v557 = vpop.f32.mrb[0].mxu0
    %558 = vmatprep.mubr.bf16.mxu0 0
    %559 = vmatmul.mubr.bf16.gmra.mrb[0].mxu0 %v411
    %v560 = vpop.f32.mrb[0].mxu0
    %v561 = vadd.f32 %v444, %v560
    %v562 = vpop.f32.mrb[0].mxu0
    %v563 = vpop.f32.mrb[0].mxu0
    %v564 = vadd.f32 %v444, %v563
    %v565 = vpop.f32.mrb[0].mxu0
    %566 = vmatprep.mubr.bf16.mxu0 0
    %567 = vmatmul.mubr.bf16.gmra.mrb[0].mxu0 %v412
    %v568 = vpop.f32.mrb[0].mxu0
    %v569 = vadd.f32 %v444, %v568
    %v570 = vpop.f32.mrb[0].mxu0
    %v571 = vpop.f32.mrb[0].mxu0
    %v572 = vadd.f32 %v444, %v571
    %v573 = vpop.f32.mrb[0].mxu0
    %574 = vmatprep.mubr.bf16.mxu0 0
    %575 = vmatmul.mubr.bf16.gmra.mrb[0].mxu0 %v413
    %v576 = vpop.f32.mrb[0].mxu0
    %v577 = vadd.f32 %v444, %v576
    %v578 = vpop.f32.mrb[0].mxu0
    %v579 = vpop.f32.mrb[0].mxu0
    %v580 = vadd.f32 %v444, %v579
    %v581 = vpop.f32.mrb[0].mxu0
    %582 = vmatprep.mubr.bf16.mxu0 0
    %583 = vmatmul.mubr.bf16.gmra.mrb[0].mxu0 %v414
    %v584 = vpop.f32.mrb[0].mxu0
    %v585 = vadd.f32 %v444, %v584
    %v586 = vpop.f32.mrb[0].mxu0
    %v587 = vpop.f32.mrb[0].mxu0
    %v588 = vadd.f32 %v444, %v587
    %v589 = vpop.f32.mrb[0].mxu0
    %590 = vmatprep.mubr.bf16.mxu0 0
    %591 = vmatmul.mubr.bf16.gmra.mrb[0].mxu0 %v415
    %v592 = vpop.f32.mrb[0].mxu0
    %v593 = vadd.f32 %v444, %v592
    %v594 = vpop.f32.mrb[0].mxu0
    %v595 = vpop.f32.mrb[0].mxu0
    %v596 = vadd.f32 %v444, %v595
    %v597 = vpop.f32.mrb[0].mxu0
    %598 = vmatprep.mubr.bf16.mxu0 0
    %599 = vmatmul.mubr.bf16.gmra.mrb[0].mxu0 %v416
    %v600 = vpop.f32.mrb[0].mxu0
    %v601 = vadd.f32 %v444, %v600
    %v602 = vpop.f32.mrb[0].mxu0
    %v603 = vpop.f32.mrb[0].mxu0
    %v604 = vadd.f32 %v444, %v603
    %v605 = vpop.f32.mrb[0].mxu0
    %606 = vmatprep.mubr.bf16.mxu0 0
    %607 = vmatmul.mubr.bf16.gmra.mrb[0].mxu0 %v417
    %v608 = vpop.f32.mrb[0].mxu0
    %v609 = vadd.f32 %v444, %v608
    %v610 = vpop.f32.mrb[0].mxu0
    %v611 = vpop.f32.mrb[0].mxu0
    %v612 = vadd.f32 %v444, %v611
    %v613 = vpop.f32.mrb[0].mxu0
    %614 = vmatprep.mubr.bf16.mxu0 0
    %615 = vmatmul.mubr.bf16.gmra.mrb[0].mxu0 %v418
    %v616 = vpop.f32.mrb[0].mxu0
    %v617 = vadd.f32 %v444, %v616
    %v618 = vpop.f32.mrb[0].mxu0
    %v619 = vpop.f32.mrb[0].mxu0
    %v620 = vadd.f32 %v444, %v619
    %v621 = vpop.f32.mrb[0].mxu0
    %622 = vmatprep.mubr.bf16.mxu0 0
    %623 = vmatmul.mubr.bf16.gmra.mrb[0].mxu0 %v419
    %v624 = vpop.f32.mrb[0].mxu0
    %v625 = vadd.f32 %v444, %v624
    %v626 = vpop.f32.mrb[0].mxu0
    %v627 = vpop.f32.mrb[0].mxu0
    %v628 = vadd.f32 %v444, %v627
    %v629 = vpop.f32.mrb[0].mxu0
    %630 = vmatprep.mubr.bf16.mxu0 0
    %631 = vmatmul.mubr.bf16.gmra.mrb[0].mxu0 %v420
    %v632 = vpop.f32.mrb[0].mxu0
    %v633 = vadd.f32 %v444, %v632
    %v634 = vpop.f32.mrb[0].mxu0
    %v635 = vpop.f32.mrb[0].mxu0
    %v636 = vadd.f32 %v444, %v635
    %v637 = vpop.f32.mrb[0].mxu0
    %638 = vmatprep.mubr.bf16.mxu0 0
    %639 = vmatmul.mubr.bf16.gmra.mrb[0].mxu0 %v421
    %v640 = vpop.f32.mrb[0].mxu0
    %v641 = vadd.f32 %v444, %v640
    %v642 = vpop.f32.mrb[0].mxu0
    %v643 = vpop.f32.mrb[0].mxu0
    %v644 = vadd.f32 %v444, %v643
    %v645 = vpop.f32.mrb[0].mxu0
    %646 = vmatprep.mubr.bf16.mxu0 0
    %647 = vmatmul.mubr.bf16.gmra.mrb[0].mxu0 %v422
    %v648 = vpop.f32.mrb[0].mxu0
    %v649 = vadd.f32 %v444, %v648
    %v650 = vpop.f32.mrb[0].mxu0
    %v651 = vpop.f32.mrb[0].mxu0
    %v652 = vadd.f32 %v444, %v651
    %v653 = vpop.f32.mrb[0].mxu0
    %654 = vdwg.mxu0
    %v655 = vtanh.pop %v529
    %v656 = vtanh.pop %v532
    %v657 = vtanh.pop %v537
    %v658 = vtanh.pop %v540
    %v659 = vtanh.pop %v545
    %v660 = vtanh.pop %v548
    %v661 = vtanh.pop %v553
    %v662 = vtanh.pop %v556
    %v663 = vtanh.pop %v561
    %v664 = vtanh.pop %v564
    %v665 = vtanh.pop %v569
    %v666 = vtanh.pop %v572
    %v667 = vtanh.pop %v577
    %v668 = vtanh.pop %v580
    %v669 = vtanh.pop %v585
    %v670 = vtanh.pop %v588
    %v671 = vtanh.pop %v593
    %v672 = vtanh.pop %v596
    %v673 = vtanh.pop %v601
    %v674 = vtanh.pop %v604
    %v675 = vtanh.pop %v609
    %v676 = vtanh.pop %v612
    %v677 = vtanh.pop %v617
    %v678 = vtanh.pop %v620
    %v679 = vtanh.pop %v625
    %v680 = vtanh.pop %v628
    %v681 = vtanh.pop %v633
    %v682 = vtanh.pop %v636
    %v683 = vtanh.pop %v641
    %v684 = vtanh.pop %v644
    %v685 = vtanh.pop %v649
    %v686 = vtanh.pop %v652
    %v687 = vld [vmem:[%s5] sm:$0xff]
    %v688 = vld [vmem:[#allocation2] sm:$0x1]
    %v690 = vlaneseq
    %v691 = vshrl.u32 %v690, 7
    %v692 = vsub.s32 0, %v691
    %v693 = vrot.slane %v688, %v692
    %694 = vset.pattern.permute.xlu0 0
    %695 = vperm.xlu0 %694, %v693
    %v696 = vpop.permute.xlu0 %695
    %698 = vmatprep.subr.mxu0 0.0
    %699 = vmatpush1.xpose.msra.mxu0 %v655
    %700 = vmatprep.subr.mxu0 0.0
    %701 = vmatpush1.xpose.msra.mxu0 %v656
    %702 = vmatprep.subr.mxu0 0.0
    %703 = vmatpush1.xpose.msra.mxu0 %v657
    %704 = vmatprep.subr.mxu0 0.0
    %705 = vmatpush1.xpose.msra.mxu0 %v658
    %706 = vmatprep.subr.mxu0 0.0
    %707 = vmatpush1.xpose.msra.mxu0 %v659
    %708 = vmatprep.subr.mxu0 0.0
    %709 = vmatpush1.xpose.msra.mxu0 %v660
    %710 = vmatprep.subr.mxu0 0.0
    %711 = vmatpush1.xpose.msra.mxu0 %v661
    %712 = vmatprep.subr.mxu0 0.0
    %713 = vmatpush1.xpose.msra.mxu0 %v662
    %714 = vmatprep.subr.mxu0 0.0
    %715 = vmatpush1.xpose.msra.mxu0 %v663
    %716 = vmatprep.subr.mxu0 0.0
    %717 = vmatpush1.xpose.msra.mxu0 %v664
    %718 = vmatprep.subr.mxu0 0.0
    %719 = vmatpush1.xpose.msra.mxu0 %v665
    %720 = vmatprep.subr.mxu0 0.0
    %721 = vmatpush1.xpose.msra.mxu0 %v666
    %722 = vmatprep.subr.mxu0 0.0
    %723 = vmatpush1.xpose.msra.mxu0 %v667
    %724 = vmatprep.subr.mxu0 0.0
    %725 = vmatpush1.xpose.msra.mxu0 %v668
    %726 = vmatprep.subr.mxu0 0.0
    %727 = vmatpush1.xpose.msra.mxu0 %v669
    %728 = vmatprep.subr.mxu0 0.0
    %729 = vmatpush1.xpose.msra.mxu0 %v670
    %730 = vmatprep.subr.mxu0 0.0
    %731 = vmatpush1.xpose.msra.mxu0 %v671
    %732 = vmatprep.subr.mxu0 0.0
    %733 = vmatpush1.xpose.msra.mxu0 %v672
    %734 = vmatprep.subr.mxu0 0.0
    %735 = vmatpush1.xpose.msra.mxu0 %v673
    %736 = vmatprep.subr.mxu0 0.0
    %737 = vmatpush1.xpose.msra.mxu0 %v674
    %738 = vmatprep.subr.mxu0 0.0
    %739 = vmatpush1.xpose.msra.mxu0 %v675
    %740 = vmatprep.subr.mxu0 0.0
    %741 = vmatpush1.xpose.msra.mxu0 %v676
    %742 = vmatprep.subr.mxu0 0.0
    %743 = vmatpush1.xpose.msra.mxu0 %v677
    %744 = vmatprep.subr.mxu0 0.0
    %745 = vmatpush1.xpose.msra.mxu0 %v678
    %746 = vmatprep.subr.mxu0 0.0
    %747 = vmatpush1.xpose.msra.mxu0 %v679
    %748 = vmatprep.subr.mxu0 0.0
    %749 = vmatpush1.xpose.msra.mxu0 %v680
    %750 = vmatprep.subr.mxu0 0.0
    %751 = vmatpush1.xpose.msra.mxu0 %v681
    %752 = vmatprep.subr.mxu0 0.0
    %753 = vmatpush1.xpose.msra.mxu0 %v682
    %754 = vmatprep.subr.mxu0 0.0
    %755 = vmatpush1.xpose.msra.mxu0 %v683
    %756 = vmatprep.subr.mxu0 0.0
    %757 = vmatpush1.xpose.msra.mxu0 %v684
    %758 = vmatprep.subr.mxu0 0.0
    %759 = vmatpush1.xpose.msra.mxu0 %v685
    %760 = vmatprep.subr.mxu0 0.0
    %761 = vmatpush1.xpose.msra.mxu0 %v686
    %762 = vmatprep.mubr.f32.mxu0 0.0
    %763 = vmatmul.mubr.f32.gmra.mrb[0].mxu0 %v687
    %v764 = vpop.f32.mrb[0].mxu0
    %v765 = vadd.f32 %v696, %v764
    %v766 = vpop.f32.mrb[0].mxu0
    %v767 = vadd.f32 %v696, %v766
    %768 = vdwg.mxu0
    %769 = vst [vmem:[#allocation3] sm:$0xff] %v765
    %770 = vst [vmem:[#allocation3 + $0x8] sm:$0xff] %v767
    // Predicated region
    $region30: #{tpu_custom_call.1} parent=1 // pred_check
      _
    $region31: #{tpu_custom_call.1} parent=1 // pred_check_branch
      %772 = sbr.rel (0) target = $region33
    $region32: #{tpu_custom_call.1} parent=1 // pred_region
      %s774 = ssub.s32 256, 256
      %775 = vsyncadd [#allocation4], %s774
      %s777 = sshll.u32 [#allocation3], 4
      %s778 = int_to_ptr.vmem [resolvable:$true] %s777
      %780 = dma.vmem_to_hbm [thread:$0]  %s778, 256, %s7, [#allocation4]
    $region33: #{tpu_custom_call.1} parent=1 // pred_fallthru
      _
    // Predicated region
    $region34: #{tpu_custom_call.1} parent=1 // pred_check
      _
    $region35: #{tpu_custom_call.1} parent=1 // pred_check_branch
      %782 = sbr.rel (0) target = $region37
    $region36: #{tpu_custom_call.1} parent=1 // pred_region
      %783 = dma.done [#allocation4], 256
    $region37: #{tpu_custom_call.1} parent=1 // pred_fallthru
      _
    %784 = vsyncpa [#allocation4], 1

</llo_original>
